<compile_context>
chip_gen: v5e
topology: v5e:2x2
jax: 0.10.0
libtpu: 0.0.40
codegen_flags: <defaults>
</compile_context>

<pallas_src>
import jax
import jax.numpy as jnp
from jax.experimental import pallas as pl
from jax.experimental.pallas import tpu as pltpu


def _pos_embed_kernel(w_ref, o_ref):
    # w_ref: (tile_seq, d_model) tile of W_pos
    # o_ref: (tile_batch, tile_seq, d_model) output slab — replicate across batch.
    o_ref[...] = jnp.broadcast_to(w_ref[...][None], o_ref.shape)


def _round_down(x: int, m: int) -> int:
    return (x // m) * m


def _round_up(x: int, m: int) -> int:
    return ((x + m - 1) // m) * m


def pos_embed(tokens: jax.Array, W_pos: jax.Array) -> jax.Array:
    """tokens: int[batch, seq] (only the shape is used);
    W_pos: float[n_ctx, d_model] -> float[batch, seq, d_model]."""
    batch, seq_len = tokens.shape          # static Python ints; tokens stay out of the kernel
    n_ctx, d_model = W_pos.shape
    assert seq_len <= n_ctx

    itemsize = jnp.dtype(W_pos.dtype).itemsize
    sublane = max(8, 32 // itemsize)       # 8 for f32, 16 for bf16, 32 for int8/fp8

    # --- generation-aware VMEM budgets --------------------------------------
    try:
        vmem_cap = int(pltpu.get_tpu_info().vmem_capacity_bytes)
    except Exception:
        vmem_cap = 64 << 20                # conservative default (v7x-sized)
    if vmem_cap >= (100 << 20):            # v5e / v6e: 128 MiB VMEM
        block_budget = 48 << 20
        vmem_limit_cap = 64 << 20
    else:                                  # v7x: 64 MiB per-TC VMEM
        block_budget = 24 << 20
        vmem_limit_cap = 36 << 20

    row_bytes = d_model * itemsize

    # --- choose seq tile ------------------------------------------------------
    if seq_len < sublane:
        # Tiny-seq path: slice W_pos so the (seq_len, d_model) block equals the
        # full input dims (required when tile_seq is not a sublane multiple).
        w_src = W_pos[:seq_len]
        tile_seq = seq_len
    else:
        w_src = W_pos
        # ~512 seq rows is near the measured HBM-roofline plateau; also bound by
        # the per-step budget at tile_batch=1 (2x double-buffer * (out + in)).
        max_tile_seq_budget = block_budget // (4 * row_bytes)
        tile_seq = min(512, _round_down(seq_len, sublane))
        tile_seq = min(tile_seq, max(sublane, _round_down(max_tile_seq_budget, sublane)))
        tile_seq = max(tile_seq, sublane)

    # --- choose batch tile (fill the remaining VMEM budget) -------------------
    in_block_bytes = 2 * tile_seq * row_bytes                  # double-buffered W_pos tile
    out_row_bytes = tile_seq * row_bytes                       # one batch row of the out block
    remaining = max(0, block_budget - in_block_bytes)
    max_tile_batch = max(1, remaining // (2 * out_row_bytes))  # /2 for double-buffering
    tile_batch = max(1, min(batch, max_tile_batch))

    grid_s = pl.cdiv(seq_len, tile_seq)
    grid_b = pl.cdiv(batch, tile_batch)

    # --- guarantee >= 2 grid steps (pipelining + v7x two-TC split) ------------
    if grid_s * grid_b == 1:
        if batch >= 2:
            tile_batch = (batch + 1) // 2
            grid_b = pl.cdiv(batch, tile_batch)
        elif seq_len >= 2 * sublane:
            tile_seq = _round_up((seq_len + 1) // 2, sublane)
            grid_s = pl.cdiv(seq_len, tile_seq)

    block_bytes = 2 * (tile_batch * tile_seq + tile_seq) * row_bytes
    vmem_limit = int(min(max(block_bytes + (4 << 20), 16 << 20), vmem_limit_cap))

    out_bytes = batch * seq_len * d_model * itemsize
    in_bytes = seq_len * d_model * itemsize

    out = pl.pallas_call(
        _pos_embed_kernel,
        out_shape=jax.ShapeDtypeStruct((batch, seq_len, d_model), W_pos.dtype),
        grid_spec=pltpu.PrefetchScalarGridSpec(
            num_scalar_prefetch=0,
            # Batch is the fastest-varying axis -> W_pos block index (s, 0) stays
            # constant across the inner batch steps and its DMA is skipped.
            grid=(grid_s, grid_b),
            in_specs=[
                pl.BlockSpec((tile_seq, d_model), lambda s, b: (s, 0)),
            ],
            # Lane-dense (tile_batch, tile_seq, d_model) output slab per step.
            # A partial trailing seq/batch block is masked by Pallas, so no
            # wrapper-side pad/slice is needed for ragged shapes.
            out_specs=pl.BlockSpec((tile_batch, tile_seq, d_model),
                                   lambda s, b: (b, s, 0)),
        ),
        compiler_params=pltpu.CompilerParams(
            dimension_semantics=("parallel", "parallel"),
            vmem_limit_bytes=vmem_limit,
        ),
        cost_estimate=pl.CostEstimate(
            flops=0, transcendentals=0, bytes_accessed=out_bytes + in_bytes),
    )(w_src)

    return out


if __name__ == "__main__":
    # Small, TPU-tile-friendly analogue of Config (shrunk): n_ctx=64, d_model=128.
    n_ctx, d_model = 64, 128
    batch = 2
    init_range = 0.02

    key = jax.random.PRNGKey(0)
    k_w, k_tok = jax.random.split(key)

    # Mirrors nn.init.normal_(W_pos, std=init_range).
    W_pos = (init_range * jax.random.normal(k_w, (n_ctx, d_model))).astype(jnp.float32)

    # 1) Aligned seq_len (multiple of the sublane count).
    seq_len = 8
    tokens = jax.random.randint(k_tok, (batch, seq_len), 0, 1000, dtype=jnp.int32)
    out = jax.block_until_ready(pos_embed(tokens, W_pos))
    ref = jnp.broadcast_to(W_pos[:seq_len][None, :, :], (batch, seq_len, d_model))
    assert out.shape == (batch, seq_len, d_model)
    assert out.dtype == W_pos.dtype
    assert jnp.array_equal(out, ref)

    # 2) Ragged seq_len (not a multiple of 8): exercises the masked trailing
    #    seq block — output is written at its exact shape, no post-slice.
    seq_len2 = 13
    tokens2 = jax.random.randint(k_tok, (batch, seq_len2), 0, 1000, dtype=jnp.int32)
    out2 = jax.block_until_ready(pos_embed(tokens2, W_pos))
    ref2 = jnp.broadcast_to(W_pos[:seq_len2][None, :, :], (batch, seq_len2, d_model))
    assert out2.shape == (batch, seq_len2, d_model)
    assert jnp.array_equal(out2, ref2)

    # 3) Tiny seq_len (< sublane count): exercises the full-dim W_pos block path.
    seq_len3 = 5
    tokens3 = jax.random.randint(k_tok, (batch, seq_len3), 0, 1000, dtype=jnp.int32)
    out3 = jax.block_until_ready(pos_embed(tokens3, W_pos))
    ref3 = jnp.broadcast_to(W_pos[:seq_len3][None, :, :], (batch, seq_len3, d_model))
    assert out3.shape == (batch, seq_len3, d_model)
    assert jnp.array_equal(out3, ref3)

    print("KERNEL_OK")
</pallas_src>

<mosaic_0001>
module attributes {stable_mosaic.version = 11 : i64} {
  func.func @_pos_embed_kernel(%arg0: i32, %arg1: i32, %arg2: memref<8x128xf32, #tpu.memory_space<vmem>>, %arg3: memref<1x8x128xf32, #tpu.memory_space<vmem>>) attributes {dimension_semantics = [#tpu.dimension_semantics<parallel>, #tpu.dimension_semantics<parallel>], iteration_bounds = array<i64: 1, 2>, scalar_prefetch = 0 : i64, scratch_operands = 0 : i64, tpu.core_type = #tpu.core_type<tc>, window_params = [{transform_indices = @transform_0, window_bounds = array<i64: 8, 128>}, {transform_indices = @transform_1, window_bounds = array<i64: 1, 8, 128>}]} {
    %c0 = arith.constant 0 : index
    %c0_0 = arith.constant 0 : index
    %0 = vector.load %arg2[%c0, %c0_0] : memref<8x128xf32, #tpu.memory_space<vmem>>, vector<8x128xf32>
    %1 = vector.shape_cast %0 : vector<8x128xf32> to vector<1x8x128xf32>
    %c0_1 = arith.constant 0 : index
    %c0_2 = arith.constant 0 : index
    %c0_3 = arith.constant 0 : index
    %2 = vector.load %arg3[%c0_1, %c0_2, %c0_3] : memref<1x8x128xf32, #tpu.memory_space<vmem>>, vector<1x8x128xf32>
    tpu.vector_store %arg3[%c0_1, %c0_2, %c0_3], %1 {strides = array<i32>} : memref<1x8x128xf32, #tpu.memory_space<vmem>>, vector<1x8x128xf32>,
    return
  }
  func.func @transform_0(%arg0: i32, %arg1: i32) -> (i32, i32) {
    %c0_i32 = arith.constant 0 : i32
    %c0_i32_0 = arith.constant 0 : i32
    return %arg0, %c0_i32 : i32, i32
  }
  func.func @transform_1(%arg0: i32, %arg1: i32) -> (i32, i32, i32) {
    %c0_i32 = arith.constant 0 : i32
    %c0_i32_0 = arith.constant 0 : i32
    return %arg1, %arg0, %c0_i32 : i32, i32, i32
  }
}

</mosaic_0001>

<llo_original>
// kernel: tpu_custom_call.1
$region0: #{tpu_custom_call.1}
  #allocation0 [shape = 'u32[]', space=smem, size = 0x4, offset = 0x4, fixed_abs, tag = 'smem constant byte address 0x4 - core index']
  #allocation1 [shape = 'u32[72,128]{1,0:T(1,128)}', space=vmem, size = 0x9000, scoped, tag = 'internal scratch']
  %s0 = inlined_call_operand.hbm [shape: f32[64,128], index: 0, kind: input, shape index: {}]
  %s1 = inlined_call_operand.hbm [shape: f32[2,8,128], index: 1, kind: output, shape index: {}]
  %s2 = sld [smem:[#allocation0]]
  $region41: #{tpu_custom_call.1} parent=0
    _
  %s4 = ssub.s32 1, %s2
  %s5 = scalar_select 0, %s4, %s2
  $region1: #{tpu_custom_call.1} parent=0
    #allocation2 [shape = 'u8[4096]{0}', space=vmem, size = 0x1000, scoped, tag = 'input window, operand 0, single buffered']
    #allocation3 [shape = 's32[2]{0}', space=sflag, size = 0x8, scoped, tag = 'scoped memory for tpu_custom_call.1']
    #allocation4 [shape = 's32[2]{0}', space=sflag, size = 0x8, scoped, tag = 'scoped memory for tpu_custom_call.1']
    #allocation5 [shape = 'u8[8192]{0}', space=vmem, size = 0x2000, scoped, tag = 'output window, operand 0']
    %6 = vsyncpa [#allocation3], 0
    %7 = vsyncpa [#allocation4], 0
    %s8 = scalar_lea.sflag [#allocation4], 1
    %9 = vsyncpa %s8, 0
    loop: start=0, step=1, limit=4
    $region2: #{tpu_custom_call.1} parent=1 // loop_pre_header
      _
    $region3: #{tpu_custom_call.1} parent=1 // loop_header
      %s11 = sphi 0, %s15
      %p12 = scmp.ge.s32.totalorder %s11, 4
      %s18 = sphi 0, %s30
      %s19 = sphi 0, %s26
      %s20 = sphi 0, %s18
      %s21 = sphi 0, %s19
      %s22 = sphi 0, %s20
      %s23 = sphi 0, %s21
      %s33 = sphi 0, %s35
      %s36 = sphi 0, %s33
      %s37 = sphi 0, %s36
      %s53 = sphi 0, %s37
      %s61 = sphi 0, %s63
      %s64 = sphi 0, %s61
      %s65 = sphi 0, %s64
      %s81 = sphi 0, %s65
    $region4: #{tpu_custom_call.1} parent=1 // loop_header_branch
      %14 = sbr.rel (%p12) target = $region8
    $region5: #{tpu_custom_call.1} parent=1 // loop_body
      %s16 = ssub.s32 %s11, 1
      %s17 = ssub.s32 %s11, 2
      %s24 = sadd.s32 1, %s19
      %p25 = scmp.ge.s32.totalorder %s24, 2
      %s26 = scalar_select %p25, 0, %s24
      %s27 = sadd.s32 1, %s18
      %s28 = scalar_select %p25, %s27, %s18
      %p29 = scmp.ge.s32.totalorder %s28, 1
      %s30 = scalar_select %p29, 0, %s28
      %s31 = ssub.s32 %s18, %s30
      %p32 = scmp.eq.s32.totalorder %s31, 0
      %s34 = sadd.s32 %s33, 1
      %s35 = scalar_select %p32, %s33, %s34
      %p38 = pneg %p32
      %p39 = scmp.eq.s32.totalorder %s11, 1
      %p40 = por %p38, %p39
      %p41 = scmp.ne.s32.totalorder %s33, %s36
      %p42 = scmp.eq.s32.totalorder %s11, 0
      %p43 = por %p41, %p42
      %p44 = scmp.ne.s32.totalorder %s33, %s36
      %p45 = scmp.eq.s32.totalorder %s16, 1
      %p46 = por %p44, %p45
      %p47 = scmp.ne.s32.totalorder %s36, %s37
      %p48 = scmp.eq.s32.totalorder %s16, 0
      %p49 = por %p47, %p48
      %p50 = scmp.ne.s32.totalorder %s36, %s37
      %p51 = scmp.eq.s32.totalorder %s17, 1
      %p52 = por %p50, %p51
      %p54 = scmp.ne.s32.totalorder %s37, %s53
      %p55 = scmp.eq.s32.totalorder %s17, 0
      %p56 = por %p54, %p55
      %s57 = ssub.s32 %s19, %s26
      %s58 = ssub.s32 %s18, %s30
      %s59 = sor.u32 %s57, %s58
      %p60 = scmp.eq.s32.totalorder %s59, 0
      %s62 = sadd.s32 %s61, 1
      %s63 = scalar_select %p60, %s61, %s62
      %p66 = pneg %p60
      %p67 = scmp.eq.s32.totalorder %s11, 1
      %p68 = por %p66, %p67
      %p69 = scmp.ne.s32.totalorder %s61, %s64
      %p70 = scmp.eq.s32.totalorder %s11, 0
      %p71 = por %p69, %p70
      %p72 = scmp.ne.s32.totalorder %s61, %s64
      %p73 = scmp.eq.s32.totalorder %s16, 1
      %p74 = por %p72, %p73
      %p75 = scmp.ne.s32.totalorder %s64, %s65
      %p76 = scmp.eq.s32.totalorder %s16, 0
      %p77 = por %p75, %p76
      %p78 = scmp.ne.s32.totalorder %s64, %s65
      %p79 = scmp.eq.s32.totalorder %s17, 1
      %p80 = por %p78, %p79
      %p82 = scmp.ne.s32.totalorder %s65, %s81
      %p83 = scmp.eq.s32.totalorder %s17, 0
      %p84 = por %p82, %p83
      %p85 = scmp.le.s32.totalorder 1, %s11
      %p86 = scmp.lt.s32.totalorder %s11, 3
      %p87 = pnand %p85, %p86
      %p88 = pneg %p87
      // Predicated region
      $region9: #{tpu_custom_call.1} parent=5 // pred_check
        _
      $region10: #{tpu_custom_call.1} parent=5 // pred_check_branch
        %90 = sbr.rel (%p87) target = $region12
      $region11: #{tpu_custom_call.1} parent=5 // pred_region
        %s91 = ssub.s32 %s11, 1
        // Predicated region
        $region13: #{tpu_custom_call.1} parent=11 // pred_check
          %p92 = pneg %p49
        $region14: #{tpu_custom_call.1} parent=11 // pred_check_branch
          %94 = sbr.rel (%p92) target = $region16
        $region15: #{tpu_custom_call.1} parent=11 // pred_region
          %96 = vsyncadd [#allocation3], 0
          %s97 = smul.addr %s20, 8
          %s98 = scalar_lea.hbm %s0, %s97
          %s100 = sshll.u32 %s98, 4
          %s101 = int_to_ptr.hbm [resolvable:$true] %s100
          %s102 = sshll.u32 [#allocation2], 4
          %s103 = int_to_ptr.vmem [resolvable:$true] %s102
          %105 = dma.hbm_to_vmem [thread:$0]  %s101, 128, %s103, [#allocation3]
        $region16: #{tpu_custom_call.1} parent=11 // pred_fallthru
          _
      $region12: #{tpu_custom_call.1} parent=5 // pred_fallthru
        _
      %p106 = scmp.lt.s32.totalorder %s11, 2
      // Predicated region
      $region17: #{tpu_custom_call.1} parent=5 // pred_check
        %p107 = pneg %p106
      $region18: #{tpu_custom_call.1} parent=5 // pred_check_branch
        %109 = sbr.rel (%p107) target = $region20
      $region19: #{tpu_custom_call.1} parent=5 // pred_region
        _
      $region20: #{tpu_custom_call.1} parent=5 // pred_fallthru
        _
      %p110 = scmp.le.s32.totalorder 1, %s11
      %p111 = scmp.lt.s32.totalorder %s11, 3
      %p112 = pnand %p110, %p111
      %p113 = pneg %p112
      // Predicated region
      $region21: #{tpu_custom_call.1} parent=5 // pred_check
        _
      $region22: #{tpu_custom_call.1} parent=5 // pred_check_branch
        %115 = sbr.rel (%p112) target = $region24
      $region23: #{tpu_custom_call.1} parent=5 // pred_region
        %s116 = ssub.s32 %s11, 1
        // Predicated region
        $region25: #{tpu_custom_call.1} parent=23 // pred_check
          %p117 = pneg %p49
        $region26: #{tpu_custom_call.1} parent=23 // pred_check_branch
          %119 = sbr.rel (%p117) target = $region28
        $region27: #{tpu_custom_call.1} parent=23 // pred_region
          %121 = dma.done [#allocation3], 128
        $region28: #{tpu_custom_call.1} parent=23 // pred_fallthru
          _
        %p122 = pneg %p49
        %p123 = pneg %p46
        %p124 = pneg %p77
        %p125 = pneg %p74
        %s126 = sand.u32 %s64, 1
        %s127 = scalar_lea.sflag [#allocation4], %s126
        %s128 = sand.u32 %s64, 1
        %s129 = smul.addr %s128, 8
        %s130 = scalar_lea.vmem [#allocation5], %s129
        %v131 = vld [vmem:[#allocation2] sm:$0xff]
        %132 = vst [vmem:[%s130] sm:$0xff] %v131
        %s133 = sand.u32 %s64, 1
        %s134 = scalar_lea.sflag [#allocation4], %s133
        %s135 = sand.u32 %s64, 1
        %s136 = smul.addr %s135, 8
        %s137 = scalar_lea.vmem [#allocation5], %s136
        // Predicated region
        $region29: #{tpu_custom_call.1} parent=23 // pred_check
          %p138 = pneg %p74
        $region30: #{tpu_custom_call.1} parent=23 // pred_check_branch
          %140 = sbr.rel (%p138) target = $region32
        $region31: #{tpu_custom_call.1} parent=23 // pred_region
          %142 = vsyncadd %s134, 0
          %s143 = sadd.s32 %s20, %s21
          %s144 = smul.addr %s143, 8
          %s145 = scalar_lea.hbm %s1, %s144
          %s147 = sshll.u32 %s137, 4
          %s148 = int_to_ptr.vmem [resolvable:$true] %s147
          %s149 = sshll.u32 %s145, 4
          %s150 = int_to_ptr.hbm [resolvable:$true] %s149
          %152 = dma.vmem_to_hbm [thread:$0]  %s148, 128, %s150, %s134
        $region32: #{tpu_custom_call.1} parent=23 // pred_fallthru
          _
      $region24: #{tpu_custom_call.1} parent=5 // pred_fallthru
        _
      %p153 = scmp.le.s32.totalorder 2, %s11
      // Predicated region
      $region33: #{tpu_custom_call.1} parent=5 // pred_check
        %p154 = pneg %p153
      $region34: #{tpu_custom_call.1} parent=5 // pred_check_branch
        %156 = sbr.rel (%p154) target = $region36
      $region35: #{tpu_custom_call.1} parent=5 // pred_region
        %s157 = ssub.s32 %s11, 2
        // Predicated region
        $region37: #{tpu_custom_call.1} parent=35 // pred_check
          %p158 = pneg %p80
        $region38: #{tpu_custom_call.1} parent=35 // pred_check_branch
          %160 = sbr.rel (%p158) target = $region40
        $region39: #{tpu_custom_call.1} parent=35 // pred_region
          %s161 = sand.u32 %s65, 1
          %s162 = scalar_lea.sflag [#allocation4], %s161
          %s163 = sand.u32 %s65, 1
          %s164 = smul.addr %s163, 8
          %s165 = scalar_lea.vmem [#allocation5], %s164
          %167 = dma.done %s162, 128
        $region40: #{tpu_custom_call.1} parent=35 // pred_fallthru
          _
      $region36: #{tpu_custom_call.1} parent=5 // pred_fallthru
        _
    $region6: #{tpu_custom_call.1} parent=1 // loop_footer
      %s15 = sadd.s32 1, %s11
    $region7: #{tpu_custom_call.1} parent=1 // loop_footer_branch
      %10 = sbr.rel target = $region3
    $region8: #{tpu_custom_call.1} parent=1 // loop_exit
      _
    %168 = vsyncpa [#allocation3], 1
    %s169 = scalar_lea.sflag [#allocation3], 1
    %170 = vsyncpa %s169, 1
    %171 = vsyncpa [#allocation4], 1
    %s172 = scalar_lea.sflag [#allocation4], 1
    %173 = vsyncpa %s172, 1

</llo_original>
